<compile_context>
chip_gen: v5e
topology: v5e:2x2
jax: 0.10.0
libtpu: 0.0.40
codegen_flags: <defaults>
</compile_context>

<pallas_src>
import math

import jax
import jax.numpy as jnp
from jax.experimental import pallas as pl
from jax.experimental.pallas import tpu as pltpu


def _round_up(x, m):
    return ((x + m - 1) // m) * m


# ----------------------- fused multi-layer ChebConv kernel -------------------
def _make_fused_cheb_kernel(N, K1, n_layers):
    def kernel(lbig_ref, x0_ref, w0_ref, b0_ref, wr_ref, br_ref, out_ref, y_scr):
        # lbig: [2N, 2*K1*N]        columns ordered (k, {real|imag}, node)
        # x0  : [2N, B*Cin0]        rows (ri, node), cols (batch, channel)
        # w0  : [K1, B*Cin0, B*F]   block-diagonal over batch
        # b0  : [1, B*F]
        # wr  : [max(L-1,1), K1, B*F, B*F], br: [max(L-1,1), 1, B*F]
        # out : [2N, B*F]           rows 0:N real, N:2N imag
        # y_scr: [K1*2N, B*F]
        lbig = lbig_ref[...]
        w0 = w0_ref[...]
        wr = wr_ref[...]
        br = br_ref[...]

        def layer(x_cur, get_w, bias):
            # K1 stacked X@W_k matmuls -> full-lane-width, sublane-aligned scratch stores.
            for k in range(K1):
                y_scr[k * 2 * N:(k + 1) * 2 * N, :] = jnp.dot(
                    x_cur, get_w(k), preferred_element_type=jnp.float32)
            # One long-contraction matmul: all k and all real/imag cross terms at once.
            return jnp.dot(lbig, y_scr[...],
                           preferred_element_type=jnp.float32) + bias

        x = layer(x0_ref[...], lambda k: w0[k], b0_ref[...])
        for l in range(n_layers - 1):
            x = layer(x, lambda k, l=l: wr[l, k], br[l])
        out_ref[...] = x

    return kernel


def cheb_stack_forward(L_real, L_imag, real, imag, cheb_params):
    """Run all ChebConv layers in one fused Pallas kernel.

    real/imag: [B, N, Cin]; L_*: [K+1, N, N];
    cheb_params: list of (w [K+1, 1, cin, cout], b [1, 1, cout]).
    Returns the [2N, B*F] slab: rows 0:N real, N:2N imag; columns ordered (batch, feature).
    """
    B, N, Cin = real.shape
    K1 = L_real.shape[0]
    F = cheb_params[0][0].shape[-1]
    n_layers = len(cheb_params)
    BF = B * F

    # ---- layout plumbing, done once at trace time (outside the kernel) ----
    # L_big[:, k*2N + j] = [[Lr[k], -Li[k]], [Li[k], Lr[k]]][:, j]
    top = jnp.concatenate([L_real, -L_imag], axis=-1)      # [K1, N, 2N]
    bot = jnp.concatenate([L_imag, L_real], axis=-1)       # [K1, N, 2N]
    Lk = jnp.concatenate([top, bot], axis=1)               # [K1, 2N, 2N]
    L_big = jnp.transpose(Lk, (1, 0, 2)).reshape(2 * N, K1 * 2 * N)

    # x0[ri*N + n, b*Cin + c] = X_{ri}[b, n, c]
    xr = jnp.transpose(real, (1, 0, 2)).reshape(N, B * Cin)
    xi = jnp.transpose(imag, (1, 0, 2)).reshape(N, B * Cin)
    x0 = jnp.concatenate([xr, xi], axis=0)                 # [2N, B*Cin]

    eye_b = jnp.eye(B, dtype=jnp.float32)

    def blockdiag(w):  # [K1, cin, cout] -> [K1, B*cin, B*cout]
        k1, cin, cout = w.shape
        return jnp.einsum('bd,kcf->kbcdf', eye_b, w).reshape(k1, B * cin, B * cout)

    w0_bd = blockdiag(cheb_params[0][0][:, 0])                                # [K1, B*Cin, BF]
    b0 = jnp.tile(cheb_params[0][1][0], (1, B))                               # [1, BF]
    if n_layers > 1:
        wr_bd = jnp.stack([blockdiag(p[0][:, 0]) for p in cheb_params[1:]])   # [L-1, K1, BF, BF]
        br = jnp.stack([jnp.tile(p[1][0], (1, B)) for p in cheb_params[1:]])  # [L-1, 1, BF]
    else:
        wr_bd = jnp.zeros((1, K1, BF, BF), jnp.float32)    # unused dummies (harmless)
        br = jnp.zeros((1, 1, BF), jnp.float32)

    kernel = _make_fused_cheb_kernel(N, K1, n_layers)
    out = pl.pallas_call(
        kernel,
        out_shape=jax.ShapeDtypeStruct((2 * N, BF), jnp.float32),
        grid=(1,),
        in_specs=[
            pl.BlockSpec((2 * N, K1 * 2 * N), lambda i: (0, 0)),
            pl.BlockSpec((2 * N, B * Cin), lambda i: (0, 0)),
            pl.BlockSpec(w0_bd.shape, lambda i: (0, 0, 0)),
            pl.BlockSpec((1, BF), lambda i: (0, 0)),
            pl.BlockSpec(wr_bd.shape, lambda i: (0, 0, 0, 0)),
            pl.BlockSpec(br.shape, lambda i: (0, 0, 0)),
        ],
        out_specs=pl.BlockSpec((2 * N, BF), lambda i: (0, 0)),
        scratch_shapes=[pltpu.VMEM((K1 * 2 * N, BF), jnp.float32)],
        compiler_params=pltpu.CompilerParams(
            dimension_semantics=("arbitrary",),
            vmem_limit_bytes=32 * 1024 * 1024),
    )(L_big, x0, w0_bd, b0, wr_bd, br)
    return out


# ----------------------- edge head: linear + log_softmax ---------------------
def _edge_head_kernel(x_ref, w_ref, b_ref, o_ref):
    logits = jnp.dot(x_ref[...], w_ref[...],
                     preferred_element_type=jnp.float32) + b_ref[...]
    m = jnp.max(logits, axis=-1, keepdims=True)
    s = logits - m
    lse = jnp.log(jnp.sum(jnp.exp(s), axis=-1, keepdims=True))
    o_ref[...] = s - lse


def edge_head(x, w, b, *, te=4096):
    """x: [E, Fh], w: [Fh, L], b: [1, L] -> log_softmax(x @ w + b) over the last dim.

    Tiled over edges with a large tile: per-grid-step overhead (~0.35us) dominates small
    tiles, and the [TE, label_dim] output is necessarily lane-narrow, so TE is maximised."""
    E, Fh = x.shape
    L = w.shape[-1]
    TE = min(te, _round_up(E, 8))
    E_pad = _round_up(E, TE)
    if E_pad != E:
        x = jnp.pad(x, ((0, E_pad - E), (0, 0)))
    out = pl.pallas_call(
        _edge_head_kernel,
        out_shape=jax.ShapeDtypeStruct((E_pad, L), jnp.float32),
        grid=(E_pad // TE,),
        in_specs=[
            pl.BlockSpec((TE, Fh), lambda i: (i, 0)),
            pl.BlockSpec((Fh, L), lambda i: (0, 0)),
            pl.BlockSpec((1, L), lambda i: (0, 0)),
        ],
        out_specs=pl.BlockSpec((TE, L), lambda i: (i, 0)),
        compiler_params=pltpu.CompilerParams(dimension_semantics=("parallel",)),
    )(x, w, b)
    return out[:E]


# ------------------------------ model wrapper --------------------------------
def init_params(key, in_features, num_filter, K, label_dim, layer):
    keys = jax.random.split(key, layer + 2)
    dims = [in_features] + [num_filter] * layer
    chebs = []
    for l in range(layer):
        cin, cout = dims[l], dims[l + 1]
        stdv = 1.0 / math.sqrt(cout)
        w = jax.random.uniform(keys[l], (K + 1, 1, cin, cout), jnp.float32, -stdv, stdv)
        b = jnp.zeros((1, 1, cout), jnp.float32)
        chebs.append((w, b))
    fan_in = num_filter * 2 * 2                      # num_filter * last_dim * 2
    bound = 1.0 / math.sqrt(fan_in)
    lin_w = jax.random.uniform(keys[-2], (label_dim, fan_in), jnp.float32, -bound, bound)
    lin_b = jax.random.uniform(keys[-1], (label_dim,), jnp.float32, -bound, bound)
    return chebs, (lin_w, lin_b)


def chebnet_edge_forward(chebs, linear, L_real, L_imag, real, imag, index):
    N = real.shape[1]
    F = chebs[0][0].shape[-1]
    # All stacked ChebConv layers in one fused Pallas kernel
    # (activation=False default -> no complex_relu, dropout=False -> no dropout).
    slab = cheb_stack_forward(L_real, L_imag, real, imag, chebs)   # [2N, B*F]
    # The reference only consumes x[0]; slice batch 0 straight from the slab
    # (rows 0:N / N:2N, lanes 0:F) instead of gathering/transposing the full batch.
    real0 = slab[:N, :F]                                           # [N, F]
    imag0 = slab[N:, :F]
    # TODO(synk): the data-dependent edge gather stays in plain JAX (XLA gather); fusing it
    # via scalar prefetch is possible but not worth the complexity at these shapes.
    src = index[:, 0]
    dst = index[:, 1]
    x0 = jnp.concatenate([real0[src], real0[dst], imag0[src], imag0[dst]], axis=-1)  # [E, 4F]
    lin_w, lin_b = linear
    return edge_head(x0, lin_w.T, lin_b.reshape(1, -1))


# ------------------------------ pure-JAX reference ---------------------------
def _ref_forward(chebs, linear, L_real, L_imag, real, imag, index):
    for (w, b) in chebs:
        w_ = w[:, 0]
        b_ = b[0]
        xr = (jnp.einsum('knm,bmc,kcf->bnf', L_real, real, w_)
              - jnp.einsum('knm,bmc,kcf->bnf', L_imag, imag, w_))
        xi = (jnp.einsum('knm,bmc,kcf->bnf', L_imag, real, w_)
              + jnp.einsum('knm,bmc,kcf->bnf', L_real, imag, w_))
        real, imag = xr + b_, xi + b_
    src, dst = index[:, 0], index[:, 1]
    x = jnp.concatenate([real[:, src], real[:, dst], imag[:, src], imag[:, dst]], axis=-1)[0]
    lin_w, lin_b = linear
    logits = x @ lin_w.T + lin_b
    return jax.nn.log_softmax(logits, axis=-1)


# ----------------------------------- main -------------------------------------
if __name__ == "__main__":
    key = jax.random.PRNGKey(0)
    B, N, E = 2, 16, 8
    in_features, num_filter, K, label_dim, layer = 4, 2, 2, 3, 2

    k1, k2, k3, k4, k5, kp = jax.random.split(key, 6)
    L_real = jax.random.normal(k1, (K + 1, N, N), jnp.float32) / N
    L_imag = jax.random.normal(k2, (K + 1, N, N), jnp.float32) / N
    real = jax.random.normal(k3, (B, N, in_features), jnp.float32)
    imag = jax.random.normal(k4, (B, N, in_features), jnp.float32)
    index = jax.random.randint(k5, (E, 2), 0, N, dtype=jnp.int32)

    chebs, linear = init_params(kp, in_features, num_filter, K, label_dim, layer)

    out = chebnet_edge_forward(chebs, linear, L_real, L_imag, real, imag, index)
    out = jax.block_until_ready(out)
    ref = _ref_forward(chebs, linear, L_real, L_imag, real, imag, index)

    assert out.shape == (E, label_dim)
    assert bool(jnp.all(jnp.isfinite(out)))
    assert bool(jnp.allclose(out, ref, rtol=1e-4, atol=1e-4))
    print("KERNEL_OK")
</pallas_src>

<mosaic_0001>
module attributes {stable_mosaic.version = 11 : i64} {
  func.func @kernel(%arg0: i32, %arg1: memref<32x96xf32, #tpu.memory_space<vmem>>, %arg2: memref<32x8xf32, #tpu.memory_space<vmem>>, %arg3: memref<3x8x4xf32, #tpu.memory_space<vmem>>, %arg4: memref<1x4xf32, #tpu.memory_space<vmem>>, %arg5: memref<1x3x4x4xf32, #tpu.memory_space<vmem>>, %arg6: memref<1x1x4xf32, #tpu.memory_space<vmem>>, %arg7: memref<32x4xf32, #tpu.memory_space<vmem>>, %arg8: memref<96x4xf32, #tpu.memory_space<vmem>>) attributes {dimension_semantics = [#tpu.dimension_semantics<arbitrary>], iteration_bounds = array<i64: 1>, scalar_prefetch = 0 : i64, scratch_operands = 1 : i64, tpu.core_type = #tpu.core_type<tc>, window_params = [{pipeline_mode = #tpu.pipeline_mode<synchronous>, transform_indices = @transform_0, window_bounds = array<i64: 32, 96>}, {pipeline_mode = #tpu.pipeline_mode<synchronous>, transform_indices = @transform_1, window_bounds = array<i64: 32, 8>}, {pipeline_mode = #tpu.pipeline_mode<synchronous>, transform_indices = @transform_2, window_bounds = array<i64: 3, 8, 4>}, {pipeline_mode = #tpu.pipeline_mode<synchronous>, transform_indices = @transform_3, window_bounds = array<i64: 1, 4>}, {pipeline_mode = #tpu.pipeline_mode<synchronous>, transform_indices = @transform_4, window_bounds = array<i64: 1, 3, 4, 4>}, {pipeline_mode = #tpu.pipeline_mode<synchronous>, transform_indices = @transform_5, window_bounds = array<i64: 1, 1, 4>}, {pipeline_mode = #tpu.pipeline_mode<synchronous>, transform_indices = @transform_6, window_bounds = array<i64: 32, 4>}]} {
    %c0 = arith.constant 0 : index
    %c0_0 = arith.constant 0 : index
    %0 = vector.load %arg1[%c0, %c0_0] : memref<32x96xf32, #tpu.memory_space<vmem>>, vector<32x96xf32>
    %c0_1 = arith.constant 0 : index
    %c0_2 = arith.constant 0 : index
    %c0_3 = arith.constant 0 : index
    %1 = vector.load %arg3[%c0_1, %c0_2, %c0_3] : memref<3x8x4xf32, #tpu.memory_space<vmem>>, vector<3x8x4xf32>
    %c0_4 = arith.constant 0 : index
    %c0_5 = arith.constant 0 : index
    %c0_6 = arith.constant 0 : index
    %c0_7 = arith.constant 0 : index
    %2 = vector.load %arg5[%c0_4, %c0_5, %c0_6, %c0_7] : memref<1x3x4x4xf32, #tpu.memory_space<vmem>>, vector<1x3x4x4xf32>
    %c0_8 = arith.constant 0 : index
    %c0_9 = arith.constant 0 : index
    %c0_10 = arith.constant 0 : index
    %3 = vector.load %arg6[%c0_8, %c0_9, %c0_10] : memref<1x1x4xf32, #tpu.memory_space<vmem>>, vector<1x1x4xf32>
    %c0_11 = arith.constant 0 : index
    %c0_12 = arith.constant 0 : index
    %4 = vector.load %arg2[%c0_11, %c0_12] : memref<32x8xf32, #tpu.memory_space<vmem>>, vector<32x8xf32>
    %c0_13 = arith.constant 0 : index
    %c0_14 = arith.constant 0 : index
    %5 = vector.load %arg4[%c0_13, %c0_14] : memref<1x4xf32, #tpu.memory_space<vmem>>, vector<1x4xf32>
    %6 = vector.extract_strided_slice %1 {offsets = [0, 0, 0], sizes = [1, 8, 4], strides = [1, 1, 1]} : vector<3x8x4xf32> to vector<1x8x4xf32>
    %7 = vector.shape_cast %6 : vector<1x8x4xf32> to vector<8x4xf32>
    %cst = arith.constant dense<0.000000e+00> : vector<32x4xf32>
    %8 = tpu.matmul %4, %7, %cst {dimension_numbers = #tpu.dot_dimension_numbers<[1], [0], [0], [1], [0, 0, 1, 1], [], []>} : vector<32x8xf32>, vector<8x4xf32>, vector<32x4xf32> -> vector<32x4xf32>
    %c0_15 = arith.constant 0 : index
    %c0_16 = arith.constant 0 : index
    %9 = vector.load %arg8[%c0_15, %c0_16] : memref<96x4xf32, #tpu.memory_space<vmem>>, vector<32x4xf32>
    tpu.vector_store %arg8[%c0_15, %c0_16], %8 {strides = array<i32>} : memref<96x4xf32, #tpu.memory_space<vmem>>, vector<32x4xf32>,
    %10 = vector.extract_strided_slice %1 {offsets = [1, 0, 0], sizes = [1, 8, 4], strides = [1, 1, 1]} : vector<3x8x4xf32> to vector<1x8x4xf32>
    %11 = vector.shape_cast %10 : vector<1x8x4xf32> to vector<8x4xf32>
    %cst_17 = arith.constant dense<0.000000e+00> : vector<32x4xf32>
    %12 = tpu.matmul %4, %11, %cst_17 {dimension_numbers = #tpu.dot_dimension_numbers<[1], [0], [0], [1], [0, 0, 1, 1], [], []>} : vector<32x8xf32>, vector<8x4xf32>, vector<32x4xf32> -> vector<32x4xf32>
    %c32 = arith.constant 32 : index
    %c0_18 = arith.constant 0 : index
    %13 = vector.load %arg8[%c32, %c0_18] : memref<96x4xf32, #tpu.memory_space<vmem>>, vector<32x4xf32>
    tpu.vector_store %arg8[%c32, %c0_18], %12 {strides = array<i32>} : memref<96x4xf32, #tpu.memory_space<vmem>>, vector<32x4xf32>,
    %14 = vector.extract_strided_slice %1 {offsets = [2, 0, 0], sizes = [1, 8, 4], strides = [1, 1, 1]} : vector<3x8x4xf32> to vector<1x8x4xf32>
    %15 = vector.shape_cast %14 : vector<1x8x4xf32> to vector<8x4xf32>
    %cst_19 = arith.constant dense<0.000000e+00> : vector<32x4xf32>
    %16 = tpu.matmul %4, %15, %cst_19 {dimension_numbers = #tpu.dot_dimension_numbers<[1], [0], [0], [1], [0, 0, 1, 1], [], []>} : vector<32x8xf32>, vector<8x4xf32>, vector<32x4xf32> -> vector<32x4xf32>
    %c64 = arith.constant 64 : index
    %c0_20 = arith.constant 0 : index
    %17 = vector.load %arg8[%c64, %c0_20] : memref<96x4xf32, #tpu.memory_space<vmem>>, vector<32x4xf32>
    tpu.vector_store %arg8[%c64, %c0_20], %16 {strides = array<i32>} : memref<96x4xf32, #tpu.memory_space<vmem>>, vector<32x4xf32>,
    %c0_21 = arith.constant 0 : index
    %c0_22 = arith.constant 0 : index
    %18 = vector.load %arg8[%c0_21, %c0_22] : memref<96x4xf32, #tpu.memory_space<vmem>>, vector<96x4xf32>
    %cst_23 = arith.constant dense<0.000000e+00> : vector<32x4xf32>
    %19 = tpu.matmul %0, %18, %cst_23 {dimension_numbers = #tpu.dot_dimension_numbers<[1], [0], [0], [1], [0, 0, 1, 1], [], []>} : vector<32x96xf32>, vector<96x4xf32>, vector<32x4xf32> -> vector<32x4xf32>
    %20 = vector.broadcast %5 : vector<1x4xf32> to vector<32x4xf32>
    %21 = arith.addf %19, %20 : vector<32x4xf32>
    %22 = vector.shape_cast %3 : vector<1x1x4xf32> to vector<1x4xf32>
    %23 = vector.extract_strided_slice %2 {offsets = [0, 0, 0, 0], sizes = [1, 1, 4, 4], strides = [1, 1, 1, 1]} : vector<1x3x4x4xf32> to vector<1x1x4x4xf32>
    %24 = vector.shape_cast %23 : vector<1x1x4x4xf32> to vector<4x4xf32>
    %cst_24 = arith.constant dense<0.000000e+00> : vector<32x4xf32>
    %25 = tpu.matmul %21, %24, %cst_24 {dimension_numbers = #tpu.dot_dimension_numbers<[1], [0], [0], [1], [0, 0, 1, 1], [], []>} : vector<32x4xf32>, vector<4x4xf32>, vector<32x4xf32> -> vector<32x4xf32>
    %c0_25 = arith.constant 0 : index
    %c0_26 = arith.constant 0 : index
    %26 = vector.load %arg8[%c0_25, %c0_26] : memref<96x4xf32, #tpu.memory_space<vmem>>, vector<32x4xf32>
    tpu.vector_store %arg8[%c0_25, %c0_26], %25 {strides = array<i32>} : memref<96x4xf32, #tpu.memory_space<vmem>>, vector<32x4xf32>,
    %27 = vector.extract_strided_slice %2 {offsets = [0, 1, 0, 0], sizes = [1, 1, 4, 4], strides = [1, 1, 1, 1]} : vector<1x3x4x4xf32> to vector<1x1x4x4xf32>
    %28 = vector.shape_cast %27 : vector<1x1x4x4xf32> to vector<4x4xf32>
    %cst_27 = arith.constant dense<0.000000e+00> : vector<32x4xf32>
    %29 = tpu.matmul %21, %28, %cst_27 {dimension_numbers = #tpu.dot_dimension_numbers<[1], [0], [0], [1], [0, 0, 1, 1], [], []>} : vector<32x4xf32>, vector<4x4xf32>, vector<32x4xf32> -> vector<32x4xf32>
    %c32_28 = arith.constant 32 : index
    %c0_29 = arith.constant 0 : index
    %30 = vector.load %arg8[%c32_28, %c0_29] : memref<96x4xf32, #tpu.memory_space<vmem>>, vector<32x4xf32>
    tpu.vector_store %arg8[%c32_28, %c0_29], %29 {strides = array<i32>} : memref<96x4xf32, #tpu.memory_space<vmem>>, vector<32x4xf32>,
    %31 = vector.extract_strided_slice %2 {offsets = [0, 2, 0, 0], sizes = [1, 1, 4, 4], strides = [1, 1, 1, 1]} : vector<1x3x4x4xf32> to vector<1x1x4x4xf32>
    %32 = vector.shape_cast %31 : vector<1x1x4x4xf32> to vector<4x4xf32>
    %cst_30 = arith.constant dense<0.000000e+00> : vector<32x4xf32>
    %33 = tpu.matmul %21, %32, %cst_30 {dimension_numbers = #tpu.dot_dimension_numbers<[1], [0], [0], [1], [0, 0, 1, 1], [], []>} : vector<32x4xf32>, vector<4x4xf32>, vector<32x4xf32> -> vector<32x4xf32>
    %c64_31 = arith.constant 64 : index
    %c0_32 = arith.constant 0 : index
    %34 = vector.load %arg8[%c64_31, %c0_32] : memref<96x4xf32, #tpu.memory_space<vmem>>, vector<32x4xf32>
    tpu.vector_store %arg8[%c64_31, %c0_32], %33 {strides = array<i32>} : memref<96x4xf32, #tpu.memory_space<vmem>>, vector<32x4xf32>,
    %c0_33 = arith.constant 0 : index
    %c0_34 = arith.constant 0 : index
    %35 = vector.load %arg8[%c0_33, %c0_34] : memref<96x4xf32, #tpu.memory_space<vmem>>, vector<96x4xf32>
    %cst_35 = arith.constant dense<0.000000e+00> : vector<32x4xf32>
    %36 = tpu.matmul %0, %35, %cst_35 {dimension_numbers = #tpu.dot_dimension_numbers<[1], [0], [0], [1], [0, 0, 1, 1], [], []>} : vector<32x96xf32>, vector<96x4xf32>, vector<32x4xf32> -> vector<32x4xf32>
    %37 = vector.broadcast %22 : vector<1x4xf32> to vector<32x4xf32>
    %38 = arith.addf %36, %37 : vector<32x4xf32>
    %c0_36 = arith.constant 0 : index
    %c0_37 = arith.constant 0 : index
    %39 = vector.load %arg7[%c0_36, %c0_37] : memref<32x4xf32, #tpu.memory_space<vmem>>, vector<32x4xf32>
    tpu.vector_store %arg7[%c0_36, %c0_37], %38 {strides = array<i32>} : memref<32x4xf32, #tpu.memory_space<vmem>>, vector<32x4xf32>,
    return
  }
  func.func @transform_0(%arg0: i32) -> (i32, i32) {
    %c0_i32 = arith.constant 0 : i32
    %c0_i32_0 = arith.constant 0 : i32
    %c0_i32_1 = arith.constant 0 : i32
    return %c0_i32, %c0_i32_0 : i32, i32
  }
  func.func @transform_1(%arg0: i32) -> (i32, i32) {
    %c0_i32 = arith.constant 0 : i32
    %c0_i32_0 = arith.constant 0 : i32
    %c0_i32_1 = arith.constant 0 : i32
    return %c0_i32, %c0_i32_0 : i32, i32
  }
  func.func @transform_2(%arg0: i32) -> (i32, i32, i32) {
    %c0_i32 = arith.constant 0 : i32
    %c0_i32_0 = arith.constant 0 : i32
    %c0_i32_1 = arith.constant 0 : i32
    %c0_i32_2 = arith.constant 0 : i32
    return %c0_i32, %c0_i32_0, %c0_i32_1 : i32, i32, i32
  }
  func.func @transform_3(%arg0: i32) -> (i32, i32) {
    %c0_i32 = arith.constant 0 : i32
    %c0_i32_0 = arith.constant 0 : i32
    %c0_i32_1 = arith.constant 0 : i32
    return %c0_i32, %c0_i32_0 : i32, i32
  }
  func.func @transform_4(%arg0: i32) -> (i32, i32, i32, i32) {
    %c0_i32 = arith.constant 0 : i32
    %c0_i32_0 = arith.constant 0 : i32
    %c0_i32_1 = arith.constant 0 : i32
    %c0_i32_2 = arith.constant 0 : i32
    %c0_i32_3 = arith.constant 0 : i32
    return %c0_i32, %c0_i32_0, %c0_i32_1, %c0_i32_2 : i32, i32, i32, i32
  }
  func.func @transform_5(%arg0: i32) -> (i32, i32, i32) {
    %c0_i32 = arith.constant 0 : i32
    %c0_i32_0 = arith.constant 0 : i32
    %c0_i32_1 = arith.constant 0 : i32
    %c0_i32_2 = arith.constant 0 : i32
    return %c0_i32, %c0_i32_0, %c0_i32_1 : i32, i32, i32
  }
  func.func @transform_6(%arg0: i32) -> (i32, i32) {
    %c0_i32 = arith.constant 0 : i32
    %c0_i32_0 = arith.constant 0 : i32
    %c0_i32_1 = arith.constant 0 : i32
    return %c0_i32, %c0_i32_0 : i32, i32
  }
}

</mosaic_0001>

<llo_original>
// kernel: tpu_custom_call.1
$region0: #{tpu_custom_call.1}
  #allocation0 [shape = 'u32[]', space=smem, size = 0x4, offset = 0x4, fixed_abs, tag = 'smem constant byte address 0x4 - core index']
  #allocation1 [shape = 'u32[72,128]{1,0:T(1,128)}', space=vmem, size = 0x9000, scoped, tag = 'internal scratch']
  #allocation2 [shape = 'f32[96,4]{1,0:T(8,128)}', space=vmem, size = 0xc000, scoped, tag = 'scratch operand']
  %s0 = inlined_call_operand.vmem [shape: f32[32,96], index: 0, kind: input, shape index: {}]
  %s1 = inlined_call_operand.vmem [shape: f32[32,8], index: 1, kind: input, shape index: {}]
  %s2 = inlined_call_operand.vmem [shape: f32[3,8,4], index: 2, kind: input, shape index: {}]
  %s3 = inlined_call_operand.vmem [shape: f32[1,4], index: 3, kind: input, shape index: {}]
  %s4 = inlined_call_operand.vmem [shape: f32[1,3,4,4], index: 4, kind: input, shape index: {}]
  %s5 = inlined_call_operand.vmem [shape: f32[1,1,4], index: 5, kind: input, shape index: {}]
  %s6 = inlined_call_operand.vmem [shape: f32[32,4], index: 6, kind: output, shape index: {}]
  %s7 = sld [smem:[#allocation0]]
  $region34: #{tpu_custom_call.1} parent=0
    _
  %s9 = ssub.s32 1, %s7
  %s10 = scalar_select 0, %s9, %s7
  // Predicated region
  $region2: #{tpu_custom_call.1} parent=0 // pred_check
    _
  $region3: #{tpu_custom_call.1} parent=0 // pred_check_branch
    %12 = sbr.rel (0) target = $region5
  $region4: #{tpu_custom_call.1} parent=0 // pred_region
    _
  $region5: #{tpu_custom_call.1} parent=0 // pred_fallthru
    _
  // Predicated region
  $region6: #{tpu_custom_call.1} parent=0 // pred_check
    _
  $region7: #{tpu_custom_call.1} parent=0 // pred_check_branch
    %14 = sbr.rel (0) target = $region9
  $region8: #{tpu_custom_call.1} parent=0 // pred_region
    _
  $region9: #{tpu_custom_call.1} parent=0 // pred_fallthru
    _
  // Predicated region
  $region10: #{tpu_custom_call.1} parent=0 // pred_check
    _
  $region11: #{tpu_custom_call.1} parent=0 // pred_check_branch
    %16 = sbr.rel (0) target = $region13
  $region12: #{tpu_custom_call.1} parent=0 // pred_region
    _
  $region13: #{tpu_custom_call.1} parent=0 // pred_fallthru
    _
  // Predicated region
  $region14: #{tpu_custom_call.1} parent=0 // pred_check
    _
  $region15: #{tpu_custom_call.1} parent=0 // pred_check_branch
    %18 = sbr.rel (0) target = $region17
  $region16: #{tpu_custom_call.1} parent=0 // pred_region
    _
  $region17: #{tpu_custom_call.1} parent=0 // pred_fallthru
    _
  // Predicated region
  $region18: #{tpu_custom_call.1} parent=0 // pred_check
    _
  $region19: #{tpu_custom_call.1} parent=0 // pred_check_branch
    %20 = sbr.rel (0) target = $region21
  $region20: #{tpu_custom_call.1} parent=0 // pred_region
    _
  $region21: #{tpu_custom_call.1} parent=0 // pred_fallthru
    _
  // Predicated region
  $region22: #{tpu_custom_call.1} parent=0 // pred_check
    _
  $region23: #{tpu_custom_call.1} parent=0 // pred_check_branch
    %22 = sbr.rel (0) target = $region25
  $region24: #{tpu_custom_call.1} parent=0 // pred_region
    _
  $region25: #{tpu_custom_call.1} parent=0 // pred_fallthru
    _
  %v23 = vld [vmem:[%s0] sm:$0xff]
  %v24 = vld [vmem:[%s0 + $0x8] sm:$0xff]
  %v25 = vld [vmem:[%s0 + $0x10] sm:$0xff]
  %v26 = vld [vmem:[%s0 + $0x18] sm:$0xff]
  %v27 = vld [vmem:[%s2] sm:$0xff]
  %v28 = vld [vmem:[%s2 + $0x8] sm:$0xff]
  %v29 = vld [vmem:[%s2 + $0x10] sm:$0xff]
  %v30 = vld [vmem:[%s4] sm:$0xf]
  %v31 = vld [vmem:[%s4 + $0x4] sm:$0xf]
  %v32 = vld [vmem:[%s4 + $0x8] sm:$0xf]
  %v33 = vld [vmem:[%s5] sm:$0x1]
  %v34 = vld [vmem:[%s1] sm:$0xff]
  %v35 = vld [vmem:[%s1 + $0x8] sm:$0xff]
  %v36 = vld [vmem:[%s1 + $0x10] sm:$0xff]
  %v37 = vld [vmem:[%s1 + $0x18] sm:$0xff]
  %v38 = vld [vmem:[%s3] sm:$0x1]
  %vm39 = vcmask 64512
  %v41 = vsel %vm39, %v34, 0
  %v44 = vsel %vm39, %v35, 0
  %v47 = vsel %vm39, %v36, 0
  %v50 = vsel %vm39, %v37, 0
  %52 = vmatpush.msra.mxu0 0.0
  %53 = vmatpush.msra.mxu0 0.0
  %54 = vmatpush.msra.mxu0 0.0
  %55 = vmatpush.msra.mxu0 0.0
  %56 = vmatpush.msra.mxu0 0.0
  %57 = vmatpush.msra.mxu0 0.0
  %58 = vmatpush.msra.mxu0 0.0
  %59 = vmatpush.msra.mxu0 0.0
  %60 = vmatpush.msra.mxu0 0.0
  %61 = vmatpush.msra.mxu0 0.0
  %62 = vmatpush.msra.mxu0 0.0
  %63 = vmatpush.msra.mxu0 0.0
  %64 = vmatpush.msra.mxu0 0.0
  %65 = vmatpush.msra.mxu0 0.0
  %66 = vmatpush.msra.mxu0 0.0
  %67 = vmatpush.msra.mxu0 %v27
  %68 = vmatmul.f32.gmra.mxu0 %v41
  %v69 = vpop.f32.mrf.mxu0
  %v70 = vadd.f32 0.0, %v69
  %71 = vmatmul.f32.gmra.mxu0 %v44
  %v72 = vpop.f32.mrf.mxu0
  %v73 = vadd.f32 0.0, %v72
  %74 = vmatmul.f32.gmra.mxu0 %v47
  %v75 = vpop.f32.mrf.mxu0
  %v76 = vadd.f32 0.0, %v75
  %77 = vmatmul.f32.gmra.mxu0 %v50
  %v78 = vpop.f32.mrf.mxu0
  %v79 = vadd.f32 0.0, %v78
  %80 = vdwg.mxu0
  %vm81 = vcmask 31744
  %82 = vst.msk [vmem:[#allocation2] sm:$0xff] %vm81, %v70
  %83 = vst.msk [vmem:[#allocation2 + $0x8] sm:$0xff] %vm81, %v73
  %84 = vst.msk [vmem:[#allocation2 + $0x10] sm:$0xff] %vm81, %v76
  %85 = vst.msk [vmem:[#allocation2 + $0x18] sm:$0xff] %vm81, %v79
  %86 = vmatpush.msra.mxu0 0.0
  %87 = vmatpush.msra.mxu0 0.0
  %88 = vmatpush.msra.mxu0 0.0
  %89 = vmatpush.msra.mxu0 0.0
  %90 = vmatpush.msra.mxu0 0.0
  %91 = vmatpush.msra.mxu0 0.0
  %92 = vmatpush.msra.mxu0 0.0
  %93 = vmatpush.msra.mxu0 0.0
  %94 = vmatpush.msra.mxu0 0.0
  %95 = vmatpush.msra.mxu0 0.0
  %96 = vmatpush.msra.mxu0 0.0
  %97 = vmatpush.msra.mxu0 0.0
  %98 = vmatpush.msra.mxu0 0.0
  %99 = vmatpush.msra.mxu0 0.0
  %100 = vmatpush.msra.mxu0 0.0
  %101 = vmatpush.msra.mxu0 %v28
  %102 = vmatmul.f32.gmra.mxu0 %v41
  %v103 = vpop.f32.mrf.mxu0
  %v104 = vadd.f32 0.0, %v103
  %105 = vmatmul.f32.gmra.mxu0 %v44
  %v106 = vpop.f32.mrf.mxu0
  %v107 = vadd.f32 0.0, %v106
  %108 = vmatmul.f32.gmra.mxu0 %v47
  %v109 = vpop.f32.mrf.mxu0
  %v110 = vadd.f32 0.0, %v109
  %111 = vmatmul.f32.gmra.mxu0 %v50
  %v112 = vpop.f32.mrf.mxu0
  %v113 = vadd.f32 0.0, %v112
  %114 = vdwg.mxu0
  %115 = vst.msk [vmem:[#allocation2 + $0x20] sm:$0xff] %vm81, %v104
  %116 = vst.msk [vmem:[#allocation2 + $0x28] sm:$0xff] %vm81, %v107
  %117 = vst.msk [vmem:[#allocation2 + $0x30] sm:$0xff] %vm81, %v110
  %118 = vst.msk [vmem:[#allocation2 + $0x38] sm:$0xff] %vm81, %v113
  %119 = vmatpush.msra.mxu0 0.0
  %120 = vmatpush.msra.mxu0 0.0
  %121 = vmatpush.msra.mxu0 0.0
  %122 = vmatpush.msra.mxu0 0.0
  %123 = vmatpush.msra.mxu0 0.0
  %124 = vmatpush.msra.mxu0 0.0
  %125 = vmatpush.msra.mxu0 0.0
  %126 = vmatpush.msra.mxu0 0.0
  %127 = vmatpush.msra.mxu0 0.0
  %128 = vmatpush.msra.mxu0 0.0
  %129 = vmatpush.msra.mxu0 0.0
  %130 = vmatpush.msra.mxu0 0.0
  %131 = vmatpush.msra.mxu0 0.0
  %132 = vmatpush.msra.mxu0 0.0
  %133 = vmatpush.msra.mxu0 0.0
  %134 = vmatpush.msra.mxu0 %v29
  %135 = vmatmul.f32.gmra.mxu0 %v41
  %v136 = vpop.f32.mrf.mxu0
  %v137 = vadd.f32 0.0, %v136
  %138 = vmatmul.f32.gmra.mxu0 %v44
  %v139 = vpop.f32.mrf.mxu0
  %v140 = vadd.f32 0.0, %v139
  %141 = vmatmul.f32.gmra.mxu0 %v47
  %v142 = vpop.f32.mrf.mxu0
  %v143 = vadd.f32 0.0, %v142
  %144 = vmatmul.f32.gmra.mxu0 %v50
  %v145 = vpop.f32.mrf.mxu0
  %v146 = vadd.f32 0.0, %v145
  %147 = vdwg.mxu0
  %148 = vst.msk [vmem:[#allocation2 + $0x40] sm:$0xff] %vm81, %v137
  %149 = vst.msk [vmem:[#allocation2 + $0x48] sm:$0xff] %vm81, %v140
  %150 = vst.msk [vmem:[#allocation2 + $0x50] sm:$0xff] %vm81, %v143
  %151 = vst.msk [vmem:[#allocation2 + $0x58] sm:$0xff] %vm81, %v146
  %v152 = vld [vmem:[#allocation2] sm:$0xff]
  %v153 = vld [vmem:[#allocation2 + $0x8] sm:$0xff]
  %v154 = vld [vmem:[#allocation2 + $0x10] sm:$0xff]
  %v155 = vld [vmem:[#allocation2 + $0x18] sm:$0xff]
  %v156 = vld [vmem:[#allocation2 + $0x20] sm:$0xff]
  %v157 = vld [vmem:[#allocation2 + $0x28] sm:$0xff]
  %v158 = vld [vmem:[#allocation2 + $0x30] sm:$0xff]
  %v159 = vld [vmem:[#allocation2 + $0x38] sm:$0xff]
  %v160 = vld [vmem:[#allocation2 + $0x40] sm:$0xff]
  %v161 = vld [vmem:[#allocation2 + $0x48] sm:$0xff]
  %v162 = vld [vmem:[#allocation2 + $0x50] sm:$0xff]
  %v163 = vld [vmem:[#allocation2 + $0x58] sm:$0xff]
  %v165 = vperm.slane %v38, 0
  %vm167 = vcmask 785408
  %v169 = vsel %vm167, %v23, 0
  %v172 = vsel %vm167, %v24, 0
  %v175 = vsel %vm167, %v25, 0
  %v178 = vsel %vm167, %v26, 0
  %180 = vmatpush.msra.mxu0 0.0
  %181 = vmatpush.msra.mxu0 0.0
  %182 = vmatpush.msra.mxu0 0.0
  %183 = vmatpush.msra.mxu0 0.0
  %184 = vmatpush.msra.mxu0 %v163
  %185 = vmatpush.msra.mxu0 %v162
  %186 = vmatpush.msra.mxu0 %v161
  %187 = vmatpush.msra.mxu0 %v160
  %188 = vmatpush.msra.mxu0 %v159
  %189 = vmatpush.msra.mxu0 %v158
  %190 = vmatpush.msra.mxu0 %v157
  %191 = vmatpush.msra.mxu0 %v156
  %192 = vmatpush.msra.mxu0 %v155
  %193 = vmatpush.msra.mxu0 %v154
  %194 = vmatpush.msra.mxu0 %v153
  %195 = vmatpush.msra.mxu0 %v152
  %196 = vmatmul.f32.gmra.mxu0 %v169
  %v197 = vpop.f32.mrf.mxu0
  %v198 = vadd.f32 %v165, %v197
  %199 = vmatmul.f32.gmra.mxu0 %v172
  %v200 = vpop.f32.mrf.mxu0
  %v201 = vadd.f32 %v165, %v200
  %202 = vmatmul.f32.gmra.mxu0 %v175
  %v203 = vpop.f32.mrf.mxu0
  %v204 = vadd.f32 %v165, %v203
  %205 = vmatmul.f32.gmra.mxu0 %v178
  %v206 = vpop.f32.mrf.mxu0
  %v207 = vadd.f32 %v165, %v206
  %208 = vdwg.mxu0
  %v210 = vsel %vm81, %v198, 0
  %v213 = vsel %vm81, %v201, 0
  %v216 = vsel %vm81, %v204, 0
  %v219 = vsel %vm81, %v207, 0
  %vm221 = vcmask 1043456
  %v223 = vsel %vm221, %v30, 0
  %225 = vmatpush.msra.mxu0 0.0
  %226 = vmatpush.msra.mxu0 0.0
  %227 = vmatpush.msra.mxu0 0.0
  %228 = vmatpush.msra.mxu0 0.0
  %229 = vmatpush.msra.mxu0 0.0
  %230 = vmatpush.msra.mxu0 0.0
  %231 = vmatpush.msra.mxu0 0.0
  %232 = vmatpush.msra.mxu0 0.0
  %233 = vmatpush.msra.mxu0 0.0
  %234 = vmatpush.msra.mxu0 0.0
  %235 = vmatpush.msra.mxu0 0.0
  %236 = vmatpush.msra.mxu0 0.0
  %237 = vmatpush.msra.mxu0 0.0
  %238 = vmatpush.msra.mxu0 0.0
  %239 = vmatpush.msra.mxu0 0.0
  %240 = vmatpush.msra.mxu0 %v223
  %241 = vmatmul.f32.gmra.mxu0 %v210
  %v242 = vpop.f32.mrf.mxu0
  %v243 = vadd.f32 0.0, %v242
  %244 = vmatmul.f32.gmra.mxu0 %v213
  %v245 = vpop.f32.mrf.mxu0
  %v246 = vadd.f32 0.0, %v245
  %247 = vmatmul.f32.gmra.mxu0 %v216
  %v248 = vpop.f32.mrf.mxu0
  %v249 = vadd.f32 0.0, %v248
  %250 = vmatmul.f32.gmra.mxu0 %v219
  %v251 = vpop.f32.mrf.mxu0
  %v252 = vadd.f32 0.0, %v251
  %253 = vdwg.mxu0
  %254 = vst.msk [vmem:[#allocation2] sm:$0xff] %vm81, %v243
  %255 = vst.msk [vmem:[#allocation2 + $0x8] sm:$0xff] %vm81, %v246
  %256 = vst.msk [vmem:[#allocation2 + $0x10] sm:$0xff] %vm81, %v249
  %257 = vst.msk [vmem:[#allocation2 + $0x18] sm:$0xff] %vm81, %v252
  %v259 = vsel %vm221, %v31, 0
  %261 = vmatpush.msra.mxu0 0.0
  %262 = vmatpush.msra.mxu0 0.0
  %263 = vmatpush.msra.mxu0 0.0
  %264 = vmatpush.msra.mxu0 0.0
  %265 = vmatpush.msra.mxu0 0.0
  %266 = vmatpush.msra.mxu0 0.0
  %267 = vmatpush.msra.mxu0 0.0
  %268 = vmatpush.msra.mxu0 0.0
  %269 = vmatpush.msra.mxu0 0.0
  %270 = vmatpush.msra.mxu0 0.0
  %271 = vmatpush.msra.mxu0 0.0
  %272 = vmatpush.msra.mxu0 0.0
  %273 = vmatpush.msra.mxu0 0.0
  %274 = vmatpush.msra.mxu0 0.0
  %275 = vmatpush.msra.mxu0 0.0
  %276 = vmatpush.msra.mxu0 %v259
  %277 = vmatmul.f32.gmra.mxu0 %v210
  %v278 = vpop.f32.mrf.mxu0
  %v279 = vadd.f32 0.0, %v278
  %280 = vmatmul.f32.gmra.mxu0 %v213
  %v281 = vpop.f32.mrf.mxu0
  %v282 = vadd.f32 0.0, %v281
  %283 = vmatmul.f32.gmra.mxu0 %v216
  %v284 = vpop.f32.mrf.mxu0
  %v285 = vadd.f32 0.0, %v284
  %286 = vmatmul.f32.gmra.mxu0 %v219
  %v287 = vpop.f32.mrf.mxu0
  %v288 = vadd.f32 0.0, %v287
  %289 = vdwg.mxu0
  %290 = vst.msk [vmem:[#allocation2 + $0x20] sm:$0xff] %vm81, %v279
  %291 = vst.msk [vmem:[#allocation2 + $0x28] sm:$0xff] %vm81, %v282
  %292 = vst.msk [vmem:[#allocation2 + $0x30] sm:$0xff] %vm81, %v285
  %293 = vst.msk [vmem:[#allocation2 + $0x38] sm:$0xff] %vm81, %v288
  %v295 = vsel %vm221, %v32, 0
  %297 = vmatpush.msra.mxu0 0.0
  %298 = vmatpush.msra.mxu0 0.0
  %299 = vmatpush.msra.mxu0 0.0
  %300 = vmatpush.msra.mxu0 0.0
  %301 = vmatpush.msra.mxu0 0.0
  %302 = vmatpush.msra.mxu0 0.0
  %303 = vmatpush.msra.mxu0 0.0
  %304 = vmatpush.msra.mxu0 0.0
  %305 = vmatpush.msra.mxu0 0.0
  %306 = vmatpush.msra.mxu0 0.0
  %307 = vmatpush.msra.mxu0 0.0
  %308 = vmatpush.msra.mxu0 0.0
  %309 = vmatpush.msra.mxu0 0.0
  %310 = vmatpush.msra.mxu0 0.0
  %311 = vmatpush.msra.mxu0 0.0
  %312 = vmatpush.msra.mxu0 %v295
  %313 = vmatmul.f32.gmra.mxu0 %v210
  %v314 = vpop.f32.mrf.mxu0
  %v315 = vadd.f32 0.0, %v314
  %316 = vmatmul.f32.gmra.mxu0 %v213
  %v317 = vpop.f32.mrf.mxu0
  %v318 = vadd.f32 0.0, %v317
  %319 = vmatmul.f32.gmra.mxu0 %v216
  %v320 = vpop.f32.mrf.mxu0
  %v321 = vadd.f32 0.0, %v320
  %322 = vmatmul.f32.gmra.mxu0 %v219
  %v323 = vpop.f32.mrf.mxu0
  %v324 = vadd.f32 0.0, %v323
  %325 = vdwg.mxu0
  %326 = vst.msk [vmem:[#allocation2 + $0x40] sm:$0xff] %vm81, %v315
  %327 = vst.msk [vmem:[#allocation2 + $0x48] sm:$0xff] %vm81, %v318
  %328 = vst.msk [vmem:[#allocation2 + $0x50] sm:$0xff] %vm81, %v321
  %329 = vst.msk [vmem:[#allocation2 + $0x58] sm:$0xff] %vm81, %v324
  %v330 = vld [vmem:[#allocation2] sm:$0xff]
  %v331 = vld [vmem:[#allocation2 + $0x8] sm:$0xff]
  %v332 = vld [vmem:[#allocation2 + $0x10] sm:$0xff]
  %v333 = vld [vmem:[#allocation2 + $0x18] sm:$0xff]
  %v334 = vld [vmem:[#allocation2 + $0x20] sm:$0xff]
  %v335 = vld [vmem:[#allocation2 + $0x28] sm:$0xff]
  %v336 = vld [vmem:[#allocation2 + $0x30] sm:$0xff]
  %v337 = vld [vmem:[#allocation2 + $0x38] sm:$0xff]
  %v338 = vld [vmem:[#allocation2 + $0x40] sm:$0xff]
  %v339 = vld [vmem:[#allocation2 + $0x48] sm:$0xff]
  %v340 = vld [vmem:[#allocation2 + $0x50] sm:$0xff]
  %v341 = vld [vmem:[#allocation2 + $0x58] sm:$0xff]
  %v343 = vperm.slane %v33, 0
  %345 = vmatpush.msra.mxu0 0.0
  %346 = vmatpush.msra.mxu0 0.0
  %347 = vmatpush.msra.mxu0 0.0
  %348 = vmatpush.msra.mxu0 0.0
  %349 = vmatpush.msra.mxu0 %v341
  %350 = vmatpush.msra.mxu0 %v340
  %351 = vmatpush.msra.mxu0 %v339
  %352 = vmatpush.msra.mxu0 %v338
  %353 = vmatpush.msra.mxu0 %v337
  %354 = vmatpush.msra.mxu0 %v336
  %355 = vmatpush.msra.mxu0 %v335
  %356 = vmatpush.msra.mxu0 %v334
  %357 = vmatpush.msra.mxu0 %v333
  %358 = vmatpush.msra.mxu0 %v332
  %359 = vmatpush.msra.mxu0 %v331
  %360 = vmatpush.msra.mxu0 %v330
  %361 = vmatmul.f32.gmra.mxu0 %v169
  %v362 = vpop.f32.mrf.mxu0
  %v363 = vadd.f32 %v343, %v362
  %364 = vmatmul.f32.gmra.mxu0 %v172
  %v365 = vpop.f32.mrf.mxu0
  %v366 = vadd.f32 %v343, %v365
  %367 = vmatmul.f32.gmra.mxu0 %v175
  %v368 = vpop.f32.mrf.mxu0
  %v369 = vadd.f32 %v343, %v368
  %370 = vmatmul.f32.gmra.mxu0 %v178
  %v371 = vpop.f32.mrf.mxu0
  %v372 = vadd.f32 %v343, %v371
  %373 = vdwg.mxu0
  %374 = vst.msk [vmem:[%s6] sm:$0xff] %vm81, %v363
  %375 = vst.msk [vmem:[%s6 + $0x8] sm:$0xff] %vm81, %v366
  %376 = vst.msk [vmem:[%s6 + $0x10] sm:$0xff] %vm81, %v369
  %377 = vst.msk [vmem:[%s6 + $0x18] sm:$0xff] %vm81, %v372
  // Predicated region
  $region26: #{tpu_custom_call.1} parent=0 // pred_check
    _
  $region27: #{tpu_custom_call.1} parent=0 // pred_check_branch
    %379 = sbr.rel (0) target = $region29
  $region28: #{tpu_custom_call.1} parent=0 // pred_region
    _
  $region29: #{tpu_custom_call.1} parent=0 // pred_fallthru
    _
  // Predicated region
  $region30: #{tpu_custom_call.1} parent=0 // pred_check
    _
  $region31: #{tpu_custom_call.1} parent=0 // pred_check_branch
    %381 = sbr.rel (0) target = $region33
  $region32: #{tpu_custom_call.1} parent=0 // pred_region
    _
  $region33: #{tpu_custom_call.1} parent=0 // pred_fallthru
    _

</llo_original>
